<compile_context>
chip_gen: v7x
topology: tpu7x:2x2x1
jax: 0.10.0
libtpu: 0.0.40
codegen_flags: <defaults>
</compile_context>

<pallas_src>
import functools

import jax
import jax.numpy as jnp
import numpy as np
from jax.experimental import pallas as pl
from jax.experimental.pallas import tpu as pltpu

HIDDEN_SIZE = 24
FC1_SIZE = 24
GATE_BLK = 32            # per-gate lane sub-block: H=24 data + 8 zero pad
GATE_W = 4 * GATE_BLK    # all four gates packed into a single 128-lane block
LANE = 128
SUBLANE = 8


def _dqn_kernel(x_ref, w_ih_ref, w_hh_ref, b_lstm_ref,
                w1_ref, b1_ref, w2_ref, b2_ref,
                out_ref, xp_ref, *, seq_len, batch_pad):
    BP = batch_pad
    GB = GATE_BLK

    # --- Hoisted input projection for ALL timesteps: one bf16 MXU call. ---
    # x_ref: (T*BP, S); rows of timestep t are the tile-aligned block [t*BP,(t+1)*BP).
    xp_ref[...] = (
        jnp.dot(x_ref[...].astype(jnp.bfloat16), w_ih_ref[...],
                preferred_element_type=jnp.float32)
        + b_lstm_ref[...]
    )  # (T*BP, 128) f32; i/f/o columns already pre-scaled by 0.5 (see pack_params)

    # Keep w_hh register resident across the unrolled recurrence (8 bf16 vregs).
    w_hh = w_hh_ref[...]

    # h/c each occupy a quarter vreg; lanes >= HIDDEN stay exactly 0 because the
    # corresponding packed weight/bias columns are zero.
    h = jnp.zeros((BP, GB), jnp.float32)
    c = jnp.zeros((BP, GB), jnp.float32)

    # --- Statically unrolled recurrence (T is tiny; live set per step is a few vregs,
    # so no fori_loop needed to bound live ranges with the packed-gate layout). ---
    # TODO(synk): w_hh could be held in the MXU weight staging registers across steps
    # via pltpu.matmul_push_rhs / matmul_acc_lhs / matmul_pop once tuned on hardware.
    for t in range(seq_len):
        # One small bf16 matmul on the serial path: (BP,32) @ (32,128) -> (BP,128).
        gates = xp_ref[t * BP:(t + 1) * BP, :] + jnp.dot(
            h.astype(jnp.bfloat16), w_hh, preferred_element_type=jnp.float32)
        # ONE tanh over the whole packed gate vreg (i/f/o pre-activations were
        # pre-scaled by 0.5, so sigmoid(v)=0.5*tanh(0.5*v)+0.5 falls out of it too).
        th = jnp.tanh(gates)
        # Quarter-vreg lane extraction (XLU) + tiny VPU affines.
        i_g = 0.5 * th[:, 0 * GB:1 * GB] + 0.5     # sigmoid(i)
        f_g = 0.5 * th[:, 1 * GB:2 * GB] + 0.5     # sigmoid(f)
        g_g = th[:, 2 * GB:3 * GB]                 # tanh(g)
        o_g = 0.5 * th[:, 3 * GB:4 * GB] + 0.5     # sigmoid(o)
        c = f_g * c + i_g * g_g
        h = o_g * jnp.tanh(c)

    # --- Head on the last hidden state (one-time, f32): fc1 + ReLU, then fc2. ---
    z = jnp.maximum(
        jnp.dot(h, w1_ref[...], preferred_element_type=jnp.float32) + b1_ref[...], 0.0)
    out_ref[...] = (
        jnp.dot(z, w2_ref[...], preferred_element_type=jnp.float32) + b2_ref[...])


def dqn_forward(x, packed_params, action_size):
    """x: (B, T, state_size) float32 -> (B, action_size) float32."""
    B, T, S = x.shape
    BP = SUBLANE * pl.cdiv(B, SUBLANE)          # pad batch to a sublane multiple

    # Wrapper-side layout plumbing (tiny XLA ops at these shapes):
    # (B,T,S) -> (T,BP,S) -> (T*BP,S) so each timestep's rows are a contiguous,
    # tile-aligned block.
    # TODO(synk): at production B/T, feed x through a batch-tiled BlockSpec instead of
    # this wrapper transpose+pad (it materializes an extra HBM copy of x).
    x_tb = jnp.transpose(x, (1, 0, 2))                      # (T, B, S)
    x_tb = jnp.pad(x_tb, ((0, 0), (0, BP - B), (0, 0)))     # (T, BP, S)
    x_flat = x_tb.reshape(T * BP, S).astype(jnp.float32)    # (T*BP, S)

    kernel = functools.partial(_dqn_kernel, seq_len=T, batch_pad=BP)

    # Gridless single invocation: every operand is one full VMEM block (<0.25 MiB total),
    # so VMEM limits and HBM bandwidth are non-issues at these sizes.
    # TODO(synk): for production batch sizes, add a leading "parallel" batch grid axis
    # (v7x has 2 TensorCores) and allocate the X_proj scratch per batch tile, with an
    # explicit vmem_limit_bytes via pltpu.CompilerParams.
    out_p = pl.pallas_call(
        kernel,
        out_shape=jax.ShapeDtypeStruct((BP, LANE), jnp.float32),
        scratch_shapes=[pltpu.VMEM((T * BP, GATE_W), jnp.float32)],   # X_proj
    )(x_flat, *packed_params)

    return out_p[:B, :action_size]


def init_raw_params(key, state_size, action_size, hidden_size=HIDDEN_SIZE):
    """Deterministic synthetic parameters in PyTorch layouts."""
    ks = jax.random.split(key, 8)
    k_lstm = 1.0 / np.sqrt(hidden_size)
    k_fc1 = 1.0 / np.sqrt(hidden_size)
    k_fc2 = 1.0 / np.sqrt(FC1_SIZE)
    u = lambda k, shape, s: jax.random.uniform(k, shape, jnp.float32, -s, s)

    w_ih = u(ks[0], (4 * hidden_size, state_size), k_lstm)   # (4H, S)
    w_hh = u(ks[1], (4 * hidden_size, hidden_size), k_lstm)  # (4H, H)
    b_ih = u(ks[2], (4 * hidden_size,), k_lstm)
    b_hh = u(ks[3], (4 * hidden_size,), k_lstm)
    w1 = u(ks[4], (FC1_SIZE, hidden_size), k_fc1)            # (24, H)
    b1 = u(ks[5], (FC1_SIZE,), k_fc1)
    w2 = u(ks[6], (action_size, FC1_SIZE), k_fc2)            # (A, 24)
    b2 = u(ks[7], (action_size,), k_fc2)
    return (w_ih, w_hh, b_ih, b_hh, w1, b1, w2, b2)


def pack_params(raw, hidden_size=HIDDEN_SIZE):
    """Transpose to x@W layout, pack the 4 gates into one 128-lane block and pre-scale.

    Gate g of PyTorch order [i,f,g,o] occupies lanes [g*32, g*32+H); padded lanes are
    zero.  The i/f/o columns (weights AND bias) are pre-scaled by 0.5 (exact in bf16)
    so the kernel gets sigmoid(v)=0.5*tanh(0.5*v)+0.5 and tanh(g) from one tanh pass.
    LSTM weights are stored in bf16 (MXU operands); head weights stay f32.
    """
    w_ih, w_hh, b_ih, b_hh, w1, b1, w2, b2 = raw
    H = hidden_size
    GB = GATE_BLK
    F1 = w1.shape[0]
    A = w2.shape[0]
    gate_scale = (0.5, 0.5, 1.0, 0.5)   # [i, f, g, o]

    def pack_gates(m):  # (rows, 4H) -> (rows, 4*GB)
        out = jnp.zeros((m.shape[0], 4 * GB), jnp.float32)
        for g in range(4):
            out = out.at[:, g * GB:g * GB + H].set(
                gate_scale[g] * m[:, g * H:(g + 1) * H])
        return out

    w_ih_p = pack_gates(w_ih.T).astype(jnp.bfloat16)                  # (S, 128) bf16
    w_hh_p = jnp.zeros((GB, 4 * GB), jnp.float32).at[:H, :].set(
        pack_gates(w_hh.T)).astype(jnp.bfloat16)                      # (32, 128) bf16
    b_p = pack_gates((b_ih + b_hh)[None, :])                          # (1, 128) f32

    w1_p = jnp.zeros((GB, LANE), jnp.float32).at[:H, :F1].set(w1.T)   # (32, 128)
    b1_p = jnp.zeros((1, LANE), jnp.float32).at[:, :F1].set(b1[None, :])
    w2_p = jnp.zeros((LANE, LANE), jnp.float32).at[:F1, :A].set(w2.T)
    b2_p = jnp.zeros((1, LANE), jnp.float32).at[:, :A].set(b2[None, :])
    return (w_ih_p, w_hh_p, b_p, w1_p, b1_p, w2_p, b2_p)


def dqn_reference(x, raw, *, hidden_size=HIDDEN_SIZE):
    """Pure-JAX f32 reference mirroring torch.nn.LSTM + fc1(ReLU) + fc2."""
    w_ih, w_hh, b_ih, b_hh, w1, b1, w2, b2 = raw
    B, T, _ = x.shape
    H = hidden_size
    h = jnp.zeros((B, H), jnp.float32)
    c = jnp.zeros((B, H), jnp.float32)
    for t in range(T):
        gates = x[:, t, :] @ w_ih.T + h @ w_hh.T + b_ih + b_hh
        i = jax.nn.sigmoid(gates[:, 0 * H:1 * H])
        f = jax.nn.sigmoid(gates[:, 1 * H:2 * H])
        g = jnp.tanh(gates[:, 2 * H:3 * H])
        o = jax.nn.sigmoid(gates[:, 3 * H:4 * H])
        c = f * c + i * g
        h = o * jnp.tanh(c)
    z = jnp.maximum(h @ w1.T + b1, 0.0)
    return z @ w2.T + b2


if __name__ == "__main__":
    batch, seq, state_size, action_size = 2, 8, 4, 3

    key = jax.random.PRNGKey(0)
    k_x, k_p = jax.random.split(key)
    x = jax.random.normal(k_x, (batch, seq, state_size), dtype=jnp.float32)
    raw_params = init_raw_params(k_p, state_size, action_size)
    packed_params = pack_params(raw_params)

    out = dqn_forward(x, packed_params, action_size)
    out = jax.block_until_ready(out)

    ref = dqn_reference(x, raw_params)
    assert out.shape == (batch, action_size)
    # Tolerance reflects bf16 MXU operands in the kernel (f32 accumulation); the
    # observed error is ~1e-3 absolute, well inside 2e-2.
    np.testing.assert_allclose(np.asarray(out), np.asarray(ref), rtol=2e-2, atol=2e-2)

    print("KERNEL_OK")
</pallas_src>

<mosaic_0001>
module attributes {stable_mosaic.version = 11 : i64} {
  func.func @_dqn_kernel(%arg0: memref<64x4xf32, #tpu.memory_space<vmem>>, %arg1: memref<4x128xbf16, #tpu.memory_space<vmem>>, %arg2: memref<32x128xbf16, #tpu.memory_space<vmem>>, %arg3: memref<1x128xf32, #tpu.memory_space<vmem>>, %arg4: memref<32x128xf32, #tpu.memory_space<vmem>>, %arg5: memref<1x128xf32, #tpu.memory_space<vmem>>, %arg6: memref<128x128xf32, #tpu.memory_space<vmem>>, %arg7: memref<1x128xf32, #tpu.memory_space<vmem>>, %arg8: memref<8x128xf32, #tpu.memory_space<vmem>>, %arg9: memref<64x128xf32, #tpu.memory_space<vmem>>) attributes {dimension_semantics = [], scalar_prefetch = 0 : i64, scratch_operands = 1 : i64, tpu.core_type = #tpu.core_type<tc>} {
    %c0 = arith.constant 0 : index
    %c0_0 = arith.constant 0 : index
    %0 = vector.load %arg0[%c0, %c0_0] : memref<64x4xf32, #tpu.memory_space<vmem>>, vector<64x4xf32>
    %1 = arith.truncf %0 : vector<64x4xf32> to vector<64x4xbf16>
    %c0_1 = arith.constant 0 : index
    %c0_2 = arith.constant 0 : index
    %2 = vector.load %arg1[%c0_1, %c0_2] : memref<4x128xbf16, #tpu.memory_space<vmem>>, vector<4x128xbf16>
    %cst = arith.constant dense<0.000000e+00> : vector<64x128xf32>
    %3 = tpu.matmul %1, %2, %cst {dimension_numbers = #tpu.dot_dimension_numbers<[1], [0], [0], [1], [0, 0, 1, 1], [], []>} : vector<64x4xbf16>, vector<4x128xbf16>, vector<64x128xf32> -> vector<64x128xf32>
    %c0_3 = arith.constant 0 : index
    %c0_4 = arith.constant 0 : index
    %4 = vector.load %arg3[%c0_3, %c0_4] : memref<1x128xf32, #tpu.memory_space<vmem>>, vector<1x128xf32>
    %5 = vector.broadcast %4 : vector<1x128xf32> to vector<64x128xf32>
    %6 = arith.addf %3, %5 : vector<64x128xf32>
    %c0_5 = arith.constant 0 : index
    %c0_6 = arith.constant 0 : index
    %7 = vector.load %arg9[%c0_5, %c0_6] : memref<64x128xf32, #tpu.memory_space<vmem>>, vector<64x128xf32>
    tpu.vector_store %arg9[%c0_5, %c0_6], %6 {strides = array<i32>} : memref<64x128xf32, #tpu.memory_space<vmem>>, vector<64x128xf32>,
    %c0_7 = arith.constant 0 : index
    %c0_8 = arith.constant 0 : index
    %8 = vector.load %arg2[%c0_7, %c0_8] : memref<32x128xbf16, #tpu.memory_space<vmem>>, vector<32x128xbf16>
    %cst_9 = arith.constant 0.000000e+00 : f32
    %9 = vector.broadcast %cst_9 : f32 to vector<8x32xf32>
    %cst_10 = arith.constant 0.000000e+00 : f32
    %10 = vector.broadcast %cst_10 : f32 to vector<8x32xf32>
    %c0_11 = arith.constant 0 : index
    %c0_12 = arith.constant 0 : index
    %11 = vector.load %arg9[%c0_11, %c0_12] : memref<64x128xf32, #tpu.memory_space<vmem>>, vector<8x128xf32>
    %12 = arith.truncf %9 : vector<8x32xf32> to vector<8x32xbf16>
    %cst_13 = arith.constant dense<0.000000e+00> : vector<8x128xf32>
    %13 = tpu.matmul %12, %8, %cst_13 {dimension_numbers = #tpu.dot_dimension_numbers<[1], [0], [0], [1], [0, 0, 1, 1], [], []>} : vector<8x32xbf16>, vector<32x128xbf16>, vector<8x128xf32> -> vector<8x128xf32>
    %14 = arith.addf %11, %13 : vector<8x128xf32>
    %15 = math.tanh %14 : vector<8x128xf32>
    %16 = vector.extract_strided_slice %15 {offsets = [0, 0], sizes = [8, 32], strides = [1, 1]} : vector<8x128xf32> to vector<8x32xf32>
    %cst_14 = arith.constant 5.000000e-01 : f32
    %17 = vector.broadcast %cst_14 : f32 to vector<8x32xf32>
    %18 = arith.mulf %17, %16 : vector<8x32xf32>
    %cst_15 = arith.constant 5.000000e-01 : f32
    %19 = vector.broadcast %cst_15 : f32 to vector<8x32xf32>
    %20 = arith.addf %18, %19 : vector<8x32xf32>
    %21 = vector.extract_strided_slice %15 {offsets = [0, 32], sizes = [8, 32], strides = [1, 1]} : vector<8x128xf32> to vector<8x32xf32>
    %cst_16 = arith.constant 5.000000e-01 : f32
    %22 = vector.broadcast %cst_16 : f32 to vector<8x32xf32>
    %23 = arith.mulf %22, %21 : vector<8x32xf32>
    %cst_17 = arith.constant 5.000000e-01 : f32
    %24 = vector.broadcast %cst_17 : f32 to vector<8x32xf32>
    %25 = arith.addf %23, %24 : vector<8x32xf32>
    %26 = vector.extract_strided_slice %15 {offsets = [0, 64], sizes = [8, 32], strides = [1, 1]} : vector<8x128xf32> to vector<8x32xf32>
    %27 = vector.extract_strided_slice %15 {offsets = [0, 96], sizes = [8, 32], strides = [1, 1]} : vector<8x128xf32> to vector<8x32xf32>
    %cst_18 = arith.constant 5.000000e-01 : f32
    %28 = vector.broadcast %cst_18 : f32 to vector<8x32xf32>
    %29 = arith.mulf %28, %27 : vector<8x32xf32>
    %cst_19 = arith.constant 5.000000e-01 : f32
    %30 = vector.broadcast %cst_19 : f32 to vector<8x32xf32>
    %31 = arith.addf %29, %30 : vector<8x32xf32>
    %32 = arith.mulf %25, %10 : vector<8x32xf32>
    %33 = arith.mulf %20, %26 : vector<8x32xf32>
    %34 = arith.addf %32, %33 : vector<8x32xf32>
    %35 = math.tanh %34 : vector<8x32xf32>
    %36 = arith.mulf %31, %35 : vector<8x32xf32>
    %c8 = arith.constant 8 : index
    %c0_20 = arith.constant 0 : index
    %37 = vector.load %arg9[%c8, %c0_20] : memref<64x128xf32, #tpu.memory_space<vmem>>, vector<8x128xf32>
    %38 = arith.truncf %36 : vector<8x32xf32> to vector<8x32xbf16>
    %cst_21 = arith.constant dense<0.000000e+00> : vector<8x128xf32>
    %39 = tpu.matmul %38, %8, %cst_21 {dimension_numbers = #tpu.dot_dimension_numbers<[1], [0], [0], [1], [0, 0, 1, 1], [], []>} : vector<8x32xbf16>, vector<32x128xbf16>, vector<8x128xf32> -> vector<8x128xf32>
    %40 = arith.addf %37, %39 : vector<8x128xf32>
    %41 = math.tanh %40 : vector<8x128xf32>
    %42 = vector.extract_strided_slice %41 {offsets = [0, 0], sizes = [8, 32], strides = [1, 1]} : vector<8x128xf32> to vector<8x32xf32>
    %cst_22 = arith.constant 5.000000e-01 : f32
    %43 = vector.broadcast %cst_22 : f32 to vector<8x32xf32>
    %44 = arith.mulf %43, %42 : vector<8x32xf32>
    %cst_23 = arith.constant 5.000000e-01 : f32
    %45 = vector.broadcast %cst_23 : f32 to vector<8x32xf32>
    %46 = arith.addf %44, %45 : vector<8x32xf32>
    %47 = vector.extract_strided_slice %41 {offsets = [0, 32], sizes = [8, 32], strides = [1, 1]} : vector<8x128xf32> to vector<8x32xf32>
    %cst_24 = arith.constant 5.000000e-01 : f32
    %48 = vector.broadcast %cst_24 : f32 to vector<8x32xf32>
    %49 = arith.mulf %48, %47 : vector<8x32xf32>
    %cst_25 = arith.constant 5.000000e-01 : f32
    %50 = vector.broadcast %cst_25 : f32 to vector<8x32xf32>
    %51 = arith.addf %49, %50 : vector<8x32xf32>
    %52 = vector.extract_strided_slice %41 {offsets = [0, 64], sizes = [8, 32], strides = [1, 1]} : vector<8x128xf32> to vector<8x32xf32>
    %53 = vector.extract_strided_slice %41 {offsets = [0, 96], sizes = [8, 32], strides = [1, 1]} : vector<8x128xf32> to vector<8x32xf32>
    %cst_26 = arith.constant 5.000000e-01 : f32
    %54 = vector.broadcast %cst_26 : f32 to vector<8x32xf32>
    %55 = arith.mulf %54, %53 : vector<8x32xf32>
    %cst_27 = arith.constant 5.000000e-01 : f32
    %56 = vector.broadcast %cst_27 : f32 to vector<8x32xf32>
    %57 = arith.addf %55, %56 : vector<8x32xf32>
    %58 = arith.mulf %51, %34 : vector<8x32xf32>
    %59 = arith.mulf %46, %52 : vector<8x32xf32>
    %60 = arith.addf %58, %59 : vector<8x32xf32>
    %61 = math.tanh %60 : vector<8x32xf32>
    %62 = arith.mulf %57, %61 : vector<8x32xf32>
    %c16 = arith.constant 16 : index
    %c0_28 = arith.constant 0 : index
    %63 = vector.load %arg9[%c16, %c0_28] : memref<64x128xf32, #tpu.memory_space<vmem>>, vector<8x128xf32>
    %64 = arith.truncf %62 : vector<8x32xf32> to vector<8x32xbf16>
    %cst_29 = arith.constant dense<0.000000e+00> : vector<8x128xf32>
    %65 = tpu.matmul %64, %8, %cst_29 {dimension_numbers = #tpu.dot_dimension_numbers<[1], [0], [0], [1], [0, 0, 1, 1], [], []>} : vector<8x32xbf16>, vector<32x128xbf16>, vector<8x128xf32> -> vector<8x128xf32>
    %66 = arith.addf %63, %65 : vector<8x128xf32>
    %67 = math.tanh %66 : vector<8x128xf32>
    %68 = vector.extract_strided_slice %67 {offsets = [0, 0], sizes = [8, 32], strides = [1, 1]} : vector<8x128xf32> to vector<8x32xf32>
    %cst_30 = arith.constant 5.000000e-01 : f32
    %69 = vector.broadcast %cst_30 : f32 to vector<8x32xf32>
    %70 = arith.mulf %69, %68 : vector<8x32xf32>
    %cst_31 = arith.constant 5.000000e-01 : f32
    %71 = vector.broadcast %cst_31 : f32 to vector<8x32xf32>
    %72 = arith.addf %70, %71 : vector<8x32xf32>
    %73 = vector.extract_strided_slice %67 {offsets = [0, 32], sizes = [8, 32], strides = [1, 1]} : vector<8x128xf32> to vector<8x32xf32>
    %cst_32 = arith.constant 5.000000e-01 : f32
    %74 = vector.broadcast %cst_32 : f32 to vector<8x32xf32>
    %75 = arith.mulf %74, %73 : vector<8x32xf32>
    %cst_33 = arith.constant 5.000000e-01 : f32
    %76 = vector.broadcast %cst_33 : f32 to vector<8x32xf32>
    %77 = arith.addf %75, %76 : vector<8x32xf32>
    %78 = vector.extract_strided_slice %67 {offsets = [0, 64], sizes = [8, 32], strides = [1, 1]} : vector<8x128xf32> to vector<8x32xf32>
    %79 = vector.extract_strided_slice %67 {offsets = [0, 96], sizes = [8, 32], strides = [1, 1]} : vector<8x128xf32> to vector<8x32xf32>
    %cst_34 = arith.constant 5.000000e-01 : f32
    %80 = vector.broadcast %cst_34 : f32 to vector<8x32xf32>
    %81 = arith.mulf %80, %79 : vector<8x32xf32>
    %cst_35 = arith.constant 5.000000e-01 : f32
    %82 = vector.broadcast %cst_35 : f32 to vector<8x32xf32>
    %83 = arith.addf %81, %82 : vector<8x32xf32>
    %84 = arith.mulf %77, %60 : vector<8x32xf32>
    %85 = arith.mulf %72, %78 : vector<8x32xf32>
    %86 = arith.addf %84, %85 : vector<8x32xf32>
    %87 = math.tanh %86 : vector<8x32xf32>
    %88 = arith.mulf %83, %87 : vector<8x32xf32>
    %c24 = arith.constant 24 : index
    %c0_36 = arith.constant 0 : index
    %89 = vector.load %arg9[%c24, %c0_36] : memref<64x128xf32, #tpu.memory_space<vmem>>, vector<8x128xf32>
    %90 = arith.truncf %88 : vector<8x32xf32> to vector<8x32xbf16>
    %cst_37 = arith.constant dense<0.000000e+00> : vector<8x128xf32>
    %91 = tpu.matmul %90, %8, %cst_37 {dimension_numbers = #tpu.dot_dimension_numbers<[1], [0], [0], [1], [0, 0, 1, 1], [], []>} : vector<8x32xbf16>, vector<32x128xbf16>, vector<8x128xf32> -> vector<8x128xf32>
    %92 = arith.addf %89, %91 : vector<8x128xf32>
    %93 = math.tanh %92 : vector<8x128xf32>
    %94 = vector.extract_strided_slice %93 {offsets = [0, 0], sizes = [8, 32], strides = [1, 1]} : vector<8x128xf32> to vector<8x32xf32>
    %cst_38 = arith.constant 5.000000e-01 : f32
    %95 = vector.broadcast %cst_38 : f32 to vector<8x32xf32>
    %96 = arith.mulf %95, %94 : vector<8x32xf32>
    %cst_39 = arith.constant 5.000000e-01 : f32
    %97 = vector.broadcast %cst_39 : f32 to vector<8x32xf32>
    %98 = arith.addf %96, %97 : vector<8x32xf32>
    %99 = vector.extract_strided_slice %93 {offsets = [0, 32], sizes = [8, 32], strides = [1, 1]} : vector<8x128xf32> to vector<8x32xf32>
    %cst_40 = arith.constant 5.000000e-01 : f32
    %100 = vector.broadcast %cst_40 : f32 to vector<8x32xf32>
    %101 = arith.mulf %100, %99 : vector<8x32xf32>
    %cst_41 = arith.constant 5.000000e-01 : f32
    %102 = vector.broadcast %cst_41 : f32 to vector<8x32xf32>
    %103 = arith.addf %101, %102 : vector<8x32xf32>
    %104 = vector.extract_strided_slice %93 {offsets = [0, 64], sizes = [8, 32], strides = [1, 1]} : vector<8x128xf32> to vector<8x32xf32>
    %105 = vector.extract_strided_slice %93 {offsets = [0, 96], sizes = [8, 32], strides = [1, 1]} : vector<8x128xf32> to vector<8x32xf32>
    %cst_42 = arith.constant 5.000000e-01 : f32
    %106 = vector.broadcast %cst_42 : f32 to vector<8x32xf32>
    %107 = arith.mulf %106, %105 : vector<8x32xf32>
    %cst_43 = arith.constant 5.000000e-01 : f32
    %108 = vector.broadcast %cst_43 : f32 to vector<8x32xf32>
    %109 = arith.addf %107, %108 : vector<8x32xf32>
    %110 = arith.mulf %103, %86 : vector<8x32xf32>
    %111 = arith.mulf %98, %104 : vector<8x32xf32>
    %112 = arith.addf %110, %111 : vector<8x32xf32>
    %113 = math.tanh %112 : vector<8x32xf32>
    %114 = arith.mulf %109, %113 : vector<8x32xf32>
    %c32 = arith.constant 32 : index
    %c0_44 = arith.constant 0 : index
    %115 = vector.load %arg9[%c32, %c0_44] : memref<64x128xf32, #tpu.memory_space<vmem>>, vector<8x128xf32>
    %116 = arith.truncf %114 : vector<8x32xf32> to vector<8x32xbf16>
    %cst_45 = arith.constant dense<0.000000e+00> : vector<8x128xf32>
    %117 = tpu.matmul %116, %8, %cst_45 {dimension_numbers = #tpu.dot_dimension_numbers<[1], [0], [0], [1], [0, 0, 1, 1], [], []>} : vector<8x32xbf16>, vector<32x128xbf16>, vector<8x128xf32> -> vector<8x128xf32>
    %118 = arith.addf %115, %117 : vector<8x128xf32>
    %119 = math.tanh %118 : vector<8x128xf32>
    %120 = vector.extract_strided_slice %119 {offsets = [0, 0], sizes = [8, 32], strides = [1, 1]} : vector<8x128xf32> to vector<8x32xf32>
    %cst_46 = arith.constant 5.000000e-01 : f32
    %121 = vector.broadcast %cst_46 : f32 to vector<8x32xf32>
    %122 = arith.mulf %121, %120 : vector<8x32xf32>
    %cst_47 = arith.constant 5.000000e-01 : f32
    %123 = vector.broadcast %cst_47 : f32 to vector<8x32xf32>
    %124 = arith.addf %122, %123 : vector<8x32xf32>
    %125 = vector.extract_strided_slice %119 {offsets = [0, 32], sizes = [8, 32], strides = [1, 1]} : vector<8x128xf32> to vector<8x32xf32>
    %cst_48 = arith.constant 5.000000e-01 : f32
    %126 = vector.broadcast %cst_48 : f32 to vector<8x32xf32>
    %127 = arith.mulf %126, %125 : vector<8x32xf32>
    %cst_49 = arith.constant 5.000000e-01 : f32
    %128 = vector.broadcast %cst_49 : f32 to vector<8x32xf32>
    %129 = arith.addf %127, %128 : vector<8x32xf32>
    %130 = vector.extract_strided_slice %119 {offsets = [0, 64], sizes = [8, 32], strides = [1, 1]} : vector<8x128xf32> to vector<8x32xf32>
    %131 = vector.extract_strided_slice %119 {offsets = [0, 96], sizes = [8, 32], strides = [1, 1]} : vector<8x128xf32> to vector<8x32xf32>
    %cst_50 = arith.constant 5.000000e-01 : f32
    %132 = vector.broadcast %cst_50 : f32 to vector<8x32xf32>
    %133 = arith.mulf %132, %131 : vector<8x32xf32>
    %cst_51 = arith.constant 5.000000e-01 : f32
    %134 = vector.broadcast %cst_51 : f32 to vector<8x32xf32>
    %135 = arith.addf %133, %134 : vector<8x32xf32>
    %136 = arith.mulf %129, %112 : vector<8x32xf32>
    %137 = arith.mulf %124, %130 : vector<8x32xf32>
    %138 = arith.addf %136, %137 : vector<8x32xf32>
    %139 = math.tanh %138 : vector<8x32xf32>
    %140 = arith.mulf %135, %139 : vector<8x32xf32>
    %c40 = arith.constant 40 : index
    %c0_52 = arith.constant 0 : index
    %141 = vector.load %arg9[%c40, %c0_52] : memref<64x128xf32, #tpu.memory_space<vmem>>, vector<8x128xf32>
    %142 = arith.truncf %140 : vector<8x32xf32> to vector<8x32xbf16>
    %cst_53 = arith.constant dense<0.000000e+00> : vector<8x128xf32>
    %143 = tpu.matmul %142, %8, %cst_53 {dimension_numbers = #tpu.dot_dimension_numbers<[1], [0], [0], [1], [0, 0, 1, 1], [], []>} : vector<8x32xbf16>, vector<32x128xbf16>, vector<8x128xf32> -> vector<8x128xf32>
    %144 = arith.addf %141, %143 : vector<8x128xf32>
    %145 = math.tanh %144 : vector<8x128xf32>
    %146 = vector.extract_strided_slice %145 {offsets = [0, 0], sizes = [8, 32], strides = [1, 1]} : vector<8x128xf32> to vector<8x32xf32>
    %cst_54 = arith.constant 5.000000e-01 : f32
    %147 = vector.broadcast %cst_54 : f32 to vector<8x32xf32>
    %148 = arith.mulf %147, %146 : vector<8x32xf32>
    %cst_55 = arith.constant 5.000000e-01 : f32
    %149 = vector.broadcast %cst_55 : f32 to vector<8x32xf32>
    %150 = arith.addf %148, %149 : vector<8x32xf32>
    %151 = vector.extract_strided_slice %145 {offsets = [0, 32], sizes = [8, 32], strides = [1, 1]} : vector<8x128xf32> to vector<8x32xf32>
    %cst_56 = arith.constant 5.000000e-01 : f32
    %152 = vector.broadcast %cst_56 : f32 to vector<8x32xf32>
    %153 = arith.mulf %152, %151 : vector<8x32xf32>
    %cst_57 = arith.constant 5.000000e-01 : f32
    %154 = vector.broadcast %cst_57 : f32 to vector<8x32xf32>
    %155 = arith.addf %153, %154 : vector<8x32xf32>
    %156 = vector.extract_strided_slice %145 {offsets = [0, 64], sizes = [8, 32], strides = [1, 1]} : vector<8x128xf32> to vector<8x32xf32>
    %157 = vector.extract_strided_slice %145 {offsets = [0, 96], sizes = [8, 32], strides = [1, 1]} : vector<8x128xf32> to vector<8x32xf32>
    %cst_58 = arith.constant 5.000000e-01 : f32
    %158 = vector.broadcast %cst_58 : f32 to vector<8x32xf32>
    %159 = arith.mulf %158, %157 : vector<8x32xf32>
    %cst_59 = arith.constant 5.000000e-01 : f32
    %160 = vector.broadcast %cst_59 : f32 to vector<8x32xf32>
    %161 = arith.addf %159, %160 : vector<8x32xf32>
    %162 = arith.mulf %155, %138 : vector<8x32xf32>
    %163 = arith.mulf %150, %156 : vector<8x32xf32>
    %164 = arith.addf %162, %163 : vector<8x32xf32>
    %165 = math.tanh %164 : vector<8x32xf32>
    %166 = arith.mulf %161, %165 : vector<8x32xf32>
    %c48 = arith.constant 48 : index
    %c0_60 = arith.constant 0 : index
    %167 = vector.load %arg9[%c48, %c0_60] : memref<64x128xf32, #tpu.memory_space<vmem>>, vector<8x128xf32>
    %168 = arith.truncf %166 : vector<8x32xf32> to vector<8x32xbf16>
    %cst_61 = arith.constant dense<0.000000e+00> : vector<8x128xf32>
    %169 = tpu.matmul %168, %8, %cst_61 {dimension_numbers = #tpu.dot_dimension_numbers<[1], [0], [0], [1], [0, 0, 1, 1], [], []>} : vector<8x32xbf16>, vector<32x128xbf16>, vector<8x128xf32> -> vector<8x128xf32>
    %170 = arith.addf %167, %169 : vector<8x128xf32>
    %171 = math.tanh %170 : vector<8x128xf32>
    %172 = vector.extract_strided_slice %171 {offsets = [0, 0], sizes = [8, 32], strides = [1, 1]} : vector<8x128xf32> to vector<8x32xf32>
    %cst_62 = arith.constant 5.000000e-01 : f32
    %173 = vector.broadcast %cst_62 : f32 to vector<8x32xf32>
    %174 = arith.mulf %173, %172 : vector<8x32xf32>
    %cst_63 = arith.constant 5.000000e-01 : f32
    %175 = vector.broadcast %cst_63 : f32 to vector<8x32xf32>
    %176 = arith.addf %174, %175 : vector<8x32xf32>
    %177 = vector.extract_strided_slice %171 {offsets = [0, 32], sizes = [8, 32], strides = [1, 1]} : vector<8x128xf32> to vector<8x32xf32>
    %cst_64 = arith.constant 5.000000e-01 : f32
    %178 = vector.broadcast %cst_64 : f32 to vector<8x32xf32>
    %179 = arith.mulf %178, %177 : vector<8x32xf32>
    %cst_65 = arith.constant 5.000000e-01 : f32
    %180 = vector.broadcast %cst_65 : f32 to vector<8x32xf32>
    %181 = arith.addf %179, %180 : vector<8x32xf32>
    %182 = vector.extract_strided_slice %171 {offsets = [0, 64], sizes = [8, 32], strides = [1, 1]} : vector<8x128xf32> to vector<8x32xf32>
    %183 = vector.extract_strided_slice %171 {offsets = [0, 96], sizes = [8, 32], strides = [1, 1]} : vector<8x128xf32> to vector<8x32xf32>
    %cst_66 = arith.constant 5.000000e-01 : f32
    %184 = vector.broadcast %cst_66 : f32 to vector<8x32xf32>
    %185 = arith.mulf %184, %183 : vector<8x32xf32>
    %cst_67 = arith.constant 5.000000e-01 : f32
    %186 = vector.broadcast %cst_67 : f32 to vector<8x32xf32>
    %187 = arith.addf %185, %186 : vector<8x32xf32>
    %188 = arith.mulf %181, %164 : vector<8x32xf32>
    %189 = arith.mulf %176, %182 : vector<8x32xf32>
    %190 = arith.addf %188, %189 : vector<8x32xf32>
    %191 = math.tanh %190 : vector<8x32xf32>
    %192 = arith.mulf %187, %191 : vector<8x32xf32>
    %c56 = arith.constant 56 : index
    %c0_68 = arith.constant 0 : index
    %193 = vector.load %arg9[%c56, %c0_68] : memref<64x128xf32, #tpu.memory_space<vmem>>, vector<8x128xf32>
    %194 = arith.truncf %192 : vector<8x32xf32> to vector<8x32xbf16>
    %cst_69 = arith.constant dense<0.000000e+00> : vector<8x128xf32>
    %195 = tpu.matmul %194, %8, %cst_69 {dimension_numbers = #tpu.dot_dimension_numbers<[1], [0], [0], [1], [0, 0, 1, 1], [], []>} : vector<8x32xbf16>, vector<32x128xbf16>, vector<8x128xf32> -> vector<8x128xf32>
    %196 = arith.addf %193, %195 : vector<8x128xf32>
    %197 = math.tanh %196 : vector<8x128xf32>
    %198 = vector.extract_strided_slice %197 {offsets = [0, 0], sizes = [8, 32], strides = [1, 1]} : vector<8x128xf32> to vector<8x32xf32>
    %cst_70 = arith.constant 5.000000e-01 : f32
    %199 = vector.broadcast %cst_70 : f32 to vector<8x32xf32>
    %200 = arith.mulf %199, %198 : vector<8x32xf32>
    %cst_71 = arith.constant 5.000000e-01 : f32
    %201 = vector.broadcast %cst_71 : f32 to vector<8x32xf32>
    %202 = arith.addf %200, %201 : vector<8x32xf32>
    %203 = vector.extract_strided_slice %197 {offsets = [0, 32], sizes = [8, 32], strides = [1, 1]} : vector<8x128xf32> to vector<8x32xf32>
    %cst_72 = arith.constant 5.000000e-01 : f32
    %204 = vector.broadcast %cst_72 : f32 to vector<8x32xf32>
    %205 = arith.mulf %204, %203 : vector<8x32xf32>
    %cst_73 = arith.constant 5.000000e-01 : f32
    %206 = vector.broadcast %cst_73 : f32 to vector<8x32xf32>
    %207 = arith.addf %205, %206 : vector<8x32xf32>
    %208 = vector.extract_strided_slice %197 {offsets = [0, 64], sizes = [8, 32], strides = [1, 1]} : vector<8x128xf32> to vector<8x32xf32>
    %209 = vector.extract_strided_slice %197 {offsets = [0, 96], sizes = [8, 32], strides = [1, 1]} : vector<8x128xf32> to vector<8x32xf32>
    %cst_74 = arith.constant 5.000000e-01 : f32
    %210 = vector.broadcast %cst_74 : f32 to vector<8x32xf32>
    %211 = arith.mulf %210, %209 : vector<8x32xf32>
    %cst_75 = arith.constant 5.000000e-01 : f32
    %212 = vector.broadcast %cst_75 : f32 to vector<8x32xf32>
    %213 = arith.addf %211, %212 : vector<8x32xf32>
    %214 = arith.mulf %207, %190 : vector<8x32xf32>
    %215 = arith.mulf %202, %208 : vector<8x32xf32>
    %216 = arith.addf %214, %215 : vector<8x32xf32>
    %217 = math.tanh %216 : vector<8x32xf32>
    %218 = arith.mulf %213, %217 : vector<8x32xf32>
    %c0_76 = arith.constant 0 : index
    %c0_77 = arith.constant 0 : index
    %219 = vector.load %arg4[%c0_76, %c0_77] : memref<32x128xf32, #tpu.memory_space<vmem>>, vector<32x128xf32>
    %cst_78 = arith.constant dense<0.000000e+00> : vector<8x128xf32>
    %220 = tpu.matmul %218, %219, %cst_78 {dimension_numbers = #tpu.dot_dimension_numbers<[1], [0], [0], [1], [0, 0, 1, 1], [], []>} : vector<8x32xf32>, vector<32x128xf32>, vector<8x128xf32> -> vector<8x128xf32>
    %c0_79 = arith.constant 0 : index
    %c0_80 = arith.constant 0 : index
    %221 = vector.load %arg5[%c0_79, %c0_80] : memref<1x128xf32, #tpu.memory_space<vmem>>, vector<1x128xf32>
    %222 = vector.broadcast %221 : vector<1x128xf32> to vector<8x128xf32>
    %223 = arith.addf %220, %222 : vector<8x128xf32>
    %cst_81 = arith.constant 0.000000e+00 : f32
    %224 = vector.broadcast %cst_81 : f32 to vector<8x128xf32>
    %225 = arith.maximumf %223, %224 : vector<8x128xf32>
    %c0_82 = arith.constant 0 : index
    %c0_83 = arith.constant 0 : index
    %226 = vector.load %arg6[%c0_82, %c0_83] : memref<128x128xf32, #tpu.memory_space<vmem>>, vector<128x128xf32>
    %cst_84 = arith.constant dense<0.000000e+00> : vector<8x128xf32>
    %227 = tpu.matmul %225, %226, %cst_84 {dimension_numbers = #tpu.dot_dimension_numbers<[1], [0], [0], [1], [0, 0, 1, 1], [], []>} : vector<8x128xf32>, vector<128x128xf32>, vector<8x128xf32> -> vector<8x128xf32>
    %c0_85 = arith.constant 0 : index
    %c0_86 = arith.constant 0 : index
    %228 = vector.load %arg7[%c0_85, %c0_86] : memref<1x128xf32, #tpu.memory_space<vmem>>, vector<1x128xf32>
    %229 = vector.broadcast %228 : vector<1x128xf32> to vector<8x128xf32>
    %230 = arith.addf %227, %229 : vector<8x128xf32>
    %c0_87 = arith.constant 0 : index
    %c0_88 = arith.constant 0 : index
    %231 = vector.load %arg8[%c0_87, %c0_88] : memref<8x128xf32, #tpu.memory_space<vmem>>, vector<8x128xf32>
    tpu.vector_store %arg8[%c0_87, %c0_88], %230 {strides = array<i32>} : memref<8x128xf32, #tpu.memory_space<vmem>>, vector<8x128xf32>,
    return
  }
}

</mosaic_0001>

<llo_original>
// kernel: tpu_custom_call.1
$region0: #{tpu_custom_call.1}
  #allocation0 [shape = 'u32[]', space=smem, size = 0x4, offset = 0x4, fixed_abs, tag = 'smem constant byte address 0x4 - core index']
  #allocation1 [shape = 'u32[144,128]{1,0:T(1,128)}', space=vmem, size = 0x12000, scoped, tag = 'internal scratch']
  #allocation2 [shape = 'f32[64,128]{1,0:T(8,128)}', space=vmem, size = 0x8000, scoped, tag = 'scratch operand']
  %s0 = inlined_call_operand.vmem [shape: f32[64,4], index: 0, kind: input, shape index: {}]
  %s1 = inlined_call_operand.vmem [shape: bf16[4,128], index: 1, kind: input, shape index: {}]
  %s2 = inlined_call_operand.vmem [shape: bf16[32,128], index: 2, kind: input, shape index: {}]
  %s3 = inlined_call_operand.vmem [shape: f32[1,128], index: 3, kind: input, shape index: {}]
  %s4 = inlined_call_operand.vmem [shape: f32[32,128], index: 4, kind: input, shape index: {}]
  %s5 = inlined_call_operand.vmem [shape: f32[1,128], index: 5, kind: input, shape index: {}]
  %s6 = inlined_call_operand.hbm [shape: f32[128,128], index: 6, kind: input, shape index: {}]
  %s7 = inlined_call_operand.vmem [shape: f32[1,128], index: 7, kind: input, shape index: {}]
  %s8 = inlined_call_operand.hbm [shape: f32[8,128], index: 8, kind: output, shape index: {}]
  %s9 = sld [smem:[#allocation0]]
  $region46: #{tpu_custom_call.1} parent=0
    _
  %s11 = ssub.s32 1, %s9
  %s12 = scalar_select 0, %s11, %s9
  $region1: #{tpu_custom_call.1} parent=0
    #allocation3 [shape = 'u8[65536]{0}', space=vmem, size = 0x10000, scoped, tag = 'input window, operand 6, single buffered']
    #allocation4 [shape = 's32[1]{0}', space=sflag, size = 0x4, scoped, tag = 'scoped memory for tpu_custom_call.1']
    #allocation5 [shape = 's32[1]{0}', space=sflag, size = 0x4, scoped, tag = 'scoped memory for tpu_custom_call.1']
    #allocation6 [shape = 'u8[4096]{0}', space=vmem, size = 0x1000, scoped, tag = 'output window, operand 0, single buffered']
    %13 = vsyncpa [#allocation4], 0
    %14 = vsyncpa [#allocation5], 0
    // Predicated region
    $region2: #{tpu_custom_call.1} parent=1 // pred_check
      _
    $region3: #{tpu_custom_call.1} parent=1 // pred_check_branch
      %16 = sbr.rel (0) target = $region5
    $region4: #{tpu_custom_call.1} parent=1 // pred_region
      _
    $region5: #{tpu_custom_call.1} parent=1 // pred_fallthru
      _
    // Predicated region
    $region6: #{tpu_custom_call.1} parent=1 // pred_check
      _
    $region7: #{tpu_custom_call.1} parent=1 // pred_check_branch
      %18 = sbr.rel (0) target = $region9
    $region8: #{tpu_custom_call.1} parent=1 // pred_region
      _
    $region9: #{tpu_custom_call.1} parent=1 // pred_fallthru
      _
    // Predicated region
    $region10: #{tpu_custom_call.1} parent=1 // pred_check
      _
    $region11: #{tpu_custom_call.1} parent=1 // pred_check_branch
      %20 = sbr.rel (0) target = $region13
    $region12: #{tpu_custom_call.1} parent=1 // pred_region
      _
    $region13: #{tpu_custom_call.1} parent=1 // pred_fallthru
      _
    // Predicated region
    $region14: #{tpu_custom_call.1} parent=1 // pred_check
      _
    $region15: #{tpu_custom_call.1} parent=1 // pred_check_branch
      %22 = sbr.rel (0) target = $region17
    $region16: #{tpu_custom_call.1} parent=1 // pred_region
      _
    $region17: #{tpu_custom_call.1} parent=1 // pred_fallthru
      _
    // Predicated region
    $region18: #{tpu_custom_call.1} parent=1 // pred_check
      _
    $region19: #{tpu_custom_call.1} parent=1 // pred_check_branch
      %24 = sbr.rel (0) target = $region21
    $region20: #{tpu_custom_call.1} parent=1 // pred_region
      _
    $region21: #{tpu_custom_call.1} parent=1 // pred_fallthru
      _
    // Predicated region
    $region22: #{tpu_custom_call.1} parent=1 // pred_check
      _
    $region23: #{tpu_custom_call.1} parent=1 // pred_check_branch
      %26 = sbr.rel (0) target = $region25
    $region24: #{tpu_custom_call.1} parent=1 // pred_region
      _
    $region25: #{tpu_custom_call.1} parent=1 // pred_fallthru
      _
    // Predicated region
    $region26: #{tpu_custom_call.1} parent=1 // pred_check
      _
    $region27: #{tpu_custom_call.1} parent=1 // pred_check_branch
      %28 = sbr.rel (0) target = $region29
    $region28: #{tpu_custom_call.1} parent=1 // pred_region
      %s30 = ssub.s32 2048, 2048
      %31 = vsyncadd [#allocation4], %s30
      %s32 = sshll.u32 [#allocation3], 4
      %s33 = int_to_ptr.vmem [resolvable:$true] %s32
      %38 = dma.hbm_to_vmem [thread:$0]  %s6, 2048, %s33, [#allocation4], 128, 128, 8
    $region29: #{tpu_custom_call.1} parent=1 // pred_fallthru
      _
    // Predicated region
    $region30: #{tpu_custom_call.1} parent=1 // pred_check
      _
    $region31: #{tpu_custom_call.1} parent=1 // pred_check_branch
      %40 = sbr.rel (0) target = $region33
    $region32: #{tpu_custom_call.1} parent=1 // pred_region
      _
    $region33: #{tpu_custom_call.1} parent=1 // pred_fallthru
      _
    // Predicated region
    $region34: #{tpu_custom_call.1} parent=1 // pred_check
      _
    $region35: #{tpu_custom_call.1} parent=1 // pred_check_branch
      %42 = sbr.rel (0) target = $region37
    $region36: #{tpu_custom_call.1} parent=1 // pred_region
      %43 = dma.done [#allocation4], 2048
    $region37: #{tpu_custom_call.1} parent=1 // pred_fallthru
      _
    %v45 = vld [vmem:[%s0] sm:$0xff]
    %v46 = vld [vmem:[%s0 + $0x8] sm:$0xff]
    %v47 = vld [vmem:[%s0 + $0x10] sm:$0xff]
    %v48 = vld [vmem:[%s0 + $0x18] sm:$0xff]
    %v49 = vld [vmem:[%s0 + $0x20] sm:$0xff]
    %v50 = vld [vmem:[%s0 + $0x28] sm:$0xff]
    %v51 = vld [vmem:[%s0 + $0x30] sm:$0xff]
    %v52 = vld [vmem:[%s0 + $0x38] sm:$0xff]
    %v53 = vpack.c.bf16 %v46, %v45
    %v54 = vpack.c.bf16 %v48, %v47
    %v55 = vpack.c.bf16 %v50, %v49
    %v56 = vpack.c.bf16 %v52, %v51
    %v57 = vld [vmem:[%s1] sm:$0x3]
    %v58 = vld [vmem:[%s3] sm:$0x1]
    %v60 = vlaneseq
    %v61 = vshrl.u32 %v60, 7
    %v62 = vsub.s32 0, %v61
    %v63 = vrot.slane %v58, %v62
    %vm65 = vcmask 31744
    %v67 = vsel %vm65, %v53, 0
    %v70 = vsel %vm65, %v54, 0
    %v73 = vsel %vm65, %v55, 0
    %v76 = vsel %vm65, %v56, 0
    %vm78 = vcmask 1041408
    %v80 = vsel %vm78, %v57, 0
    %82 = vmatprep.subr.bf16.mxu0 0
    %83 = vmatpush1.bf16.msra.mxu0 %v80
    %84 = vmatprep.subr.bf16.mxu0 0
    %85 = vmatpush1.bf16.msra.mxu0 0
    %86 = vmatprep.subr.bf16.mxu0 0
    %87 = vmatpush1.bf16.msra.mxu0 0
    %88 = vmatprep.subr.bf16.mxu0 0
    %89 = vmatpush1.bf16.msra.mxu0 0
    %90 = vmatprep.subr.bf16.mxu0 0
    %91 = vmatpush1.bf16.msra.mxu0 0
    %92 = vmatprep.subr.bf16.mxu0 0
    %93 = vmatpush1.bf16.msra.mxu0 0
    %94 = vmatprep.subr.bf16.mxu0 0
    %95 = vmatpush1.bf16.msra.mxu0 0
    %96 = vmatprep.subr.bf16.mxu0 0
    %97 = vmatpush1.bf16.msra.mxu0 0
    %98 = vmatprep.subr.bf16.mxu0 0
    %99 = vmatpush1.bf16.msra.mxu0 0
    %100 = vmatprep.subr.bf16.mxu0 0
    %101 = vmatpush1.bf16.msra.mxu0 0
    %102 = vmatprep.subr.bf16.mxu0 0
    %103 = vmatpush1.bf16.msra.mxu0 0
    %104 = vmatprep.subr.bf16.mxu0 0
    %105 = vmatpush1.bf16.msra.mxu0 0
    %106 = vmatprep.subr.bf16.mxu0 0
    %107 = vmatpush1.bf16.msra.mxu0 0
    %108 = vmatprep.subr.bf16.mxu0 0
    %109 = vmatpush1.bf16.msra.mxu0 0
    %110 = vmatprep.subr.bf16.mxu0 0
    %111 = vmatpush1.bf16.msra.mxu0 0
    %112 = vmatprep.subr.bf16.mxu0 0
    %113 = vmatpush1.bf16.msra.mxu0 0
    %114 = vmatprep.mubr.bf16.mxu0 0
    %115 = vmatmul.mubr.bf16.gmra.mrb[0].mxu0 %v67
    %v116 = vpop.f32.mrb[0].mxu0
    %v117 = vadd.f32 %v63, %v116
    %v118 = vpop.f32.mrb[0].mxu0
    %v119 = vpop.f32.mrb[0].mxu0
    %v120 = vadd.f32 %v63, %v119
    %v121 = vpop.f32.mrb[0].mxu0
    %122 = vmatprep.mubr.bf16.mxu0 0
    %123 = vmatmul.mubr.bf16.gmra.mrb[0].mxu0 %v70
    %v124 = vpop.f32.mrb[0].mxu0
    %v125 = vadd.f32 %v63, %v124
    %v126 = vpop.f32.mrb[0].mxu0
    %v127 = vpop.f32.mrb[0].mxu0
    %v128 = vadd.f32 %v63, %v127
    %v129 = vpop.f32.mrb[0].mxu0
    %130 = vmatprep.mubr.bf16.mxu0 0
    %131 = vmatmul.mubr.bf16.gmra.mrb[0].mxu0 %v73
    %v132 = vpop.f32.mrb[0].mxu0
    %v133 = vadd.f32 %v63, %v132
    %v134 = vpop.f32.mrb[0].mxu0
    %v135 = vpop.f32.mrb[0].mxu0
    %v136 = vadd.f32 %v63, %v135
    %v137 = vpop.f32.mrb[0].mxu0
    %138 = vmatprep.mubr.bf16.mxu0 0
    %139 = vmatmul.mubr.bf16.gmra.mrb[0].mxu0 %v76
    %v140 = vpop.f32.mrb[0].mxu0
    %v141 = vadd.f32 %v63, %v140
    %v142 = vpop.f32.mrb[0].mxu0
    %v143 = vpop.f32.mrb[0].mxu0
    %v144 = vadd.f32 %v63, %v143
    %v145 = vpop.f32.mrb[0].mxu0
    %146 = vdwg.mxu0
    %147 = vst [vmem:[#allocation2] sm:$0xff] %v117
    %148 = vst [vmem:[#allocation2 + $0x8] sm:$0xff] %v120
    %149 = vst [vmem:[#allocation2 + $0x10] sm:$0xff] %v125
    %150 = vst [vmem:[#allocation2 + $0x18] sm:$0xff] %v128
    %151 = vst [vmem:[#allocation2 + $0x20] sm:$0xff] %v133
    %152 = vst [vmem:[#allocation2 + $0x28] sm:$0xff] %v136
    %153 = vst [vmem:[#allocation2 + $0x30] sm:$0xff] %v141
    %154 = vst [vmem:[#allocation2 + $0x38] sm:$0xff] %v144
    %v155 = vld [vmem:[%s2] sm:$0xf]
    %v156 = vld [vmem:[%s2 + $0x4] sm:$0xf]
    %v157 = vld [vmem:[%s2 + $0x8] sm:$0xf]
    %v158 = vld [vmem:[%s2 + $0xc] sm:$0xf]
    %v159 = vld [vmem:[#allocation2] sm:$0xff]
    %v164 = vunpack.c.l.b16 %v155
    %v165 = vunpack.c.l.b16 %v156
    %v166 = vunpack.c.l.b16 %v157
    %v167 = vunpack.c.l.b16 %v158
    %v168 = vpack.c.b16 %v165, %v164
    %v169 = vpack.c.b16 %v167, %v166
    %vm172 = vcmask 261120
    %v174 = vsel %vm172, 0, 0
    %176 = vmatprep.subr.bf16.mxu0 0
    %177 = vmatpush1.bf16.msra.mxu0 %v168
    %178 = vmatprep.subr.bf16.mxu0 0
    %179 = vmatpush1.bf16.msra.mxu0 %v169
    %180 = vmatprep.subr.bf16.mxu0 0
    %181 = vmatpush1.bf16.msra.mxu0 0
    %182 = vmatprep.subr.bf16.mxu0 0
    %183 = vmatpush1.bf16.msra.mxu0 0
    %184 = vmatprep.subr.bf16.mxu0 0
    %185 = vmatpush1.bf16.msra.mxu0 0
    %186 = vmatprep.subr.bf16.mxu0 0
    %187 = vmatpush1.bf16.msra.mxu0 0
    %188 = vmatprep.subr.bf16.mxu0 0
    %189 = vmatpush1.bf16.msra.mxu0 0
    %190 = vmatprep.subr.bf16.mxu0 0
    %191 = vmatpush1.bf16.msra.mxu0 0
    %192 = vmatprep.subr.bf16.mxu0 0
    %193 = vmatpush1.bf16.msra.mxu0 0
    %194 = vmatprep.subr.bf16.mxu0 0
    %195 = vmatpush1.bf16.msra.mxu0 0
    %196 = vmatprep.subr.bf16.mxu0 0
    %197 = vmatpush1.bf16.msra.mxu0 0
    %198 = vmatprep.subr.bf16.mxu0 0
    %199 = vmatpush1.bf16.msra.mxu0 0
    %200 = vmatprep.subr.bf16.mxu0 0
    %201 = vmatpush1.bf16.msra.mxu0 0
    %202 = vmatprep.subr.bf16.mxu0 0
    %203 = vmatpush1.bf16.msra.mxu0 0
    %204 = vmatprep.subr.bf16.mxu0 0
    %205 = vmatpush1.bf16.msra.mxu0 0
    %206 = vmatprep.subr.bf16.mxu0 0
    %207 = vmatpush1.bf16.msra.mxu0 0
    %208 = vmatprep.mubr.bf16.mxu0 0
    %209 = vmatmul.mubr.bf16.gmra.mrb[0].mxu0 %v174
    %v210 = vpop.f32.mrb[0].mxu0
    %v211 = vadd.f32 0.0, %v210
    %v212 = vpop.f32.mrb[0].mxu0
    %v213 = vpop.f32.mrb[0].mxu0
    %v214 = vpop.f32.mrb[0].mxu0
    %215 = vdwg.mxu0
    %v216 = vadd.f32 %v159, %v211
    %v217 = vtanh.pop %v216
    %v218 = vmul.f32 %v217, 0.5
    %v219 = vadd.f32 %v218, 0.5
    %v220 = vmul.f32 %v219, 0.0
    %222 = vrot.lane.b32.xlu0 %v217, 64
    %v223 = vpop.permute.xlu0 %222
    %v225 = vmul.f32 %v219, %v223
    %227 = vrot.lane.b32.xlu0 %v225, 32
    %v228 = vpop.permute.xlu0 %227
    %v230 = vadd.f32 %v220, %v228
    %v231 = vtanh.pop %v230
    %233 = vrot.lane.b32.xlu0 %v231, 64
    %v234 = vpop.permute.xlu0 %233
    %v236 = vmul.f32 %v219, %v234
    %v237 = vld [vmem:[#allocation2 + $0x8] sm:$0xff]
    %v238 = vpack.c.bf16 %v236, %v236
    %240 = vrot.lane.b32.xlu0 %v238, 32
    %v241 = vpop.permute.xlu0 %240
    %v243 = vsel %vm172, %v241, 0
    %245 = vmatprep.subr.bf16.mxu0 0
    %246 = vmatpush1.bf16.msra.mxu0 %v168
    %247 = vmatprep.subr.bf16.mxu0 0
    %248 = vmatpush1.bf16.msra.mxu0 %v169
    %249 = vmatprep.subr.bf16.mxu0 0
    %250 = vmatpush1.bf16.msra.mxu0 0
    %251 = vmatprep.subr.bf16.mxu0 0
    %252 = vmatpush1.bf16.msra.mxu0 0
    %253 = vmatprep.subr.bf16.mxu0 0
    %254 = vmatpush1.bf16.msra.mxu0 0
    %255 = vmatprep.subr.bf16.mxu0 0
    %256 = vmatpush1.bf16.msra.mxu0 0
    %257 = vmatprep.subr.bf16.mxu0 0
    %258 = vmatpush1.bf16.msra.mxu0 0
    %259 = vmatprep.subr.bf16.mxu0 0
    %260 = vmatpush1.bf16.msra.mxu0 0
    %261 = vmatprep.subr.bf16.mxu0 0
    %262 = vmatpush1.bf16.msra.mxu0 0
    %263 = vmatprep.subr.bf16.mxu0 0
    %264 = vmatpush1.bf16.msra.mxu0 0
    %265 = vmatprep.subr.bf16.mxu0 0
    %266 = vmatpush1.bf16.msra.mxu0 0
    %267 = vmatprep.subr.bf16.mxu0 0
    %268 = vmatpush1.bf16.msra.mxu0 0
    %269 = vmatprep.subr.bf16.mxu0 0
    %270 = vmatpush1.bf16.msra.mxu0 0
    %271 = vmatprep.subr.bf16.mxu0 0
    %272 = vmatpush1.bf16.msra.mxu0 0
    %273 = vmatprep.subr.bf16.mxu0 0
    %274 = vmatpush1.bf16.msra.mxu0 0
    %275 = vmatprep.subr.bf16.mxu0 0
    %276 = vmatpush1.bf16.msra.mxu0 0
    %277 = vmatprep.mubr.bf16.mxu0 0
    %278 = vmatmul.mubr.bf16.gmra.mrb[0].mxu0 %v243
    %v279 = vpop.f32.mrb[0].mxu0
    %v280 = vadd.f32 0.0, %v279
    %v281 = vpop.f32.mrb[0].mxu0
    %v282 = vpop.f32.mrb[0].mxu0
    %v283 = vpop.f32.mrb[0].mxu0
    %284 = vdwg.mxu0
    %v285 = vadd.f32 %v237, %v280
    %v286 = vtanh.pop %v285
    %v287 = vmul.f32 %v286, 0.5
    %v288 = vadd.f32 %v287, 0.5
    %v289 = vmul.f32 %v288, %v230
    %291 = vrot.lane.b32.xlu0 %v286, 64
    %v292 = vpop.permute.xlu0 %291
    %v294 = vmul.f32 %v288, %v292
    %296 = vrot.lane.b32.xlu0 %v294, 32
    %v297 = vpop.permute.xlu0 %296
    %v299 = vadd.f32 %v289, %v297
    %v300 = vtanh.pop %v299
    %302 = vrot.lane.b32.xlu0 %v300, 64
    %v303 = vpop.permute.xlu0 %302
    %v305 = vmul.f32 %v288, %v303
    %v306 = vld [vmem:[#allocation2 + $0x10] sm:$0xff]
    %v307 = vpack.c.bf16 %v305, %v305
    %309 = vrot.lane.b32.xlu0 %v307, 32
    %v310 = vpop.permute.xlu0 %309
    %v312 = vsel %vm172, %v310, 0
    %314 = vmatprep.subr.bf16.mxu0 0
    %315 = vmatpush1.bf16.msra.mxu0 %v168
    %316 = vmatprep.subr.bf16.mxu0 0
    %317 = vmatpush1.bf16.msra.mxu0 %v169
    %318 = vmatprep.subr.bf16.mxu0 0
    %319 = vmatpush1.bf16.msra.mxu0 0
    %320 = vmatprep.subr.bf16.mxu0 0
    %321 = vmatpush1.bf16.msra.mxu0 0
    %322 = vmatprep.subr.bf16.mxu0 0
    %323 = vmatpush1.bf16.msra.mxu0 0
    %324 = vmatprep.subr.bf16.mxu0 0
    %325 = vmatpush1.bf16.msra.mxu0 0
    %326 = vmatprep.subr.bf16.mxu0 0
    %327 = vmatpush1.bf16.msra.mxu0 0
    %328 = vmatprep.subr.bf16.mxu0 0
    %329 = vmatpush1.bf16.msra.mxu0 0
    %330 = vmatprep.subr.bf16.mxu0 0
    %331 = vmatpush1.bf16.msra.mxu0 0
    %332 = vmatprep.subr.bf16.mxu0 0
    %333 = vmatpush1.bf16.msra.mxu0 0
    %334 = vmatprep.subr.bf16.mxu0 0
    %335 = vmatpush1.bf16.msra.mxu0 0
    %336 = vmatprep.subr.bf16.mxu0 0
    %337 = vmatpush1.bf16.msra.mxu0 0
    %338 = vmatprep.subr.bf16.mxu0 0
    %339 = vmatpush1.bf16.msra.mxu0 0
    %340 = vmatprep.subr.bf16.mxu0 0
    %341 = vmatpush1.bf16.msra.mxu0 0
    %342 = vmatprep.subr.bf16.mxu0 0
    %343 = vmatpush1.bf16.msra.mxu0 0
    %344 = vmatprep.subr.bf16.mxu0 0
    %345 = vmatpush1.bf16.msra.mxu0 0
    %346 = vmatprep.mubr.bf16.mxu0 0
    %347 = vmatmul.mubr.bf16.gmra.mrb[0].mxu0 %v312
    %v348 = vpop.f32.mrb[0].mxu0
    %v349 = vadd.f32 0.0, %v348
    %v350 = vpop.f32.mrb[0].mxu0
    %v351 = vpop.f32.mrb[0].mxu0
    %v352 = vpop.f32.mrb[0].mxu0
    %353 = vdwg.mxu0
    %v354 = vadd.f32 %v306, %v349
    %v355 = vtanh.pop %v354
    %v356 = vmul.f32 %v355, 0.5
    %v357 = vadd.f32 %v356, 0.5
    %v358 = vmul.f32 %v357, %v299
    %360 = vrot.lane.b32.xlu0 %v355, 64
    %v361 = vpop.permute.xlu0 %360
    %v363 = vmul.f32 %v357, %v361
    %365 = vrot.lane.b32.xlu0 %v363, 32
    %v366 = vpop.permute.xlu0 %365
    %v368 = vadd.f32 %v358, %v366
    %v369 = vtanh.pop %v368
    %371 = vrot.lane.b32.xlu0 %v369, 64
    %v372 = vpop.permute.xlu0 %371
    %v374 = vmul.f32 %v357, %v372
    %v375 = vld [vmem:[#allocation2 + $0x18] sm:$0xff]
    %v376 = vpack.c.bf16 %v374, %v374
    %378 = vrot.lane.b32.xlu0 %v376, 32
    %v379 = vpop.permute.xlu0 %378
    %v381 = vsel %vm172, %v379, 0
    %383 = vmatprep.subr.bf16.mxu0 0
    %384 = vmatpush1.bf16.msra.mxu0 %v168
    %385 = vmatprep.subr.bf16.mxu0 0
    %386 = vmatpush1.bf16.msra.mxu0 %v169
    %387 = vmatprep.subr.bf16.mxu0 0
    %388 = vmatpush1.bf16.msra.mxu0 0
    %389 = vmatprep.subr.bf16.mxu0 0
    %390 = vmatpush1.bf16.msra.mxu0 0
    %391 = vmatprep.subr.bf16.mxu0 0
    %392 = vmatpush1.bf16.msra.mxu0 0
    %393 = vmatprep.subr.bf16.mxu0 0
    %394 = vmatpush1.bf16.msra.mxu0 0
    %395 = vmatprep.subr.bf16.mxu0 0
    %396 = vmatpush1.bf16.msra.mxu0 0
    %397 = vmatprep.subr.bf16.mxu0 0
    %398 = vmatpush1.bf16.msra.mxu0 0
    %399 = vmatprep.subr.bf16.mxu0 0
    %400 = vmatpush1.bf16.msra.mxu0 0
    %401 = vmatprep.subr.bf16.mxu0 0
    %402 = vmatpush1.bf16.msra.mxu0 0
    %403 = vmatprep.subr.bf16.mxu0 0
    %404 = vmatpush1.bf16.msra.mxu0 0
    %405 = vmatprep.subr.bf16.mxu0 0
    %406 = vmatpush1.bf16.msra.mxu0 0
    %407 = vmatprep.subr.bf16.mxu0 0
    %408 = vmatpush1.bf16.msra.mxu0 0
    %409 = vmatprep.subr.bf16.mxu0 0
    %410 = vmatpush1.bf16.msra.mxu0 0
    %411 = vmatprep.subr.bf16.mxu0 0
    %412 = vmatpush1.bf16.msra.mxu0 0
    %413 = vmatprep.subr.bf16.mxu0 0
    %414 = vmatpush1.bf16.msra.mxu0 0
    %415 = vmatprep.mubr.bf16.mxu0 0
    %416 = vmatmul.mubr.bf16.gmra.mrb[0].mxu0 %v381
    %v417 = vpop.f32.mrb[0].mxu0
    %v418 = vadd.f32 0.0, %v417
    %v419 = vpop.f32.mrb[0].mxu0
    %v420 = vpop.f32.mrb[0].mxu0
    %v421 = vpop.f32.mrb[0].mxu0
    %422 = vdwg.mxu0
    %v423 = vadd.f32 %v375, %v418
    %v424 = vtanh.pop %v423
    %v425 = vmul.f32 %v424, 0.5
    %v426 = vadd.f32 %v425, 0.5
    %v427 = vmul.f32 %v426, %v368
    %429 = vrot.lane.b32.xlu0 %v424, 64
    %v430 = vpop.permute.xlu0 %429
    %v432 = vmul.f32 %v426, %v430
    %434 = vrot.lane.b32.xlu0 %v432, 32
    %v435 = vpop.permute.xlu0 %434
    %v437 = vadd.f32 %v427, %v435
    %v438 = vtanh.pop %v437
    %440 = vrot.lane.b32.xlu0 %v438, 64
    %v441 = vpop.permute.xlu0 %440
    %v443 = vmul.f32 %v426, %v441
    %v444 = vld [vmem:[#allocation2 + $0x20] sm:$0xff]
    %v445 = vpack.c.bf16 %v443, %v443
    %447 = vrot.lane.b32.xlu0 %v445, 32
    %v448 = vpop.permute.xlu0 %447
    %v450 = vsel %vm172, %v448, 0
    %452 = vmatprep.subr.bf16.mxu0 0
    %453 = vmatpush1.bf16.msra.mxu0 %v168
    %454 = vmatprep.subr.bf16.mxu0 0
    %455 = vmatpush1.bf16.msra.mxu0 %v169
    %456 = vmatprep.subr.bf16.mxu0 0
    %457 = vmatpush1.bf16.msra.mxu0 0
    %458 = vmatprep.subr.bf16.mxu0 0
    %459 = vmatpush1.bf16.msra.mxu0 0
    %460 = vmatprep.subr.bf16.mxu0 0
    %461 = vmatpush1.bf16.msra.mxu0 0
    %462 = vmatprep.subr.bf16.mxu0 0
    %463 = vmatpush1.bf16.msra.mxu0 0
    %464 = vmatprep.subr.bf16.mxu0 0
    %465 = vmatpush1.bf16.msra.mxu0 0
    %466 = vmatprep.subr.bf16.mxu0 0
    %467 = vmatpush1.bf16.msra.mxu0 0
    %468 = vmatprep.subr.bf16.mxu0 0
    %469 = vmatpush1.bf16.msra.mxu0 0
    %470 = vmatprep.subr.bf16.mxu0 0
    %471 = vmatpush1.bf16.msra.mxu0 0
    %472 = vmatprep.subr.bf16.mxu0 0
    %473 = vmatpush1.bf16.msra.mxu0 0
    %474 = vmatprep.subr.bf16.mxu0 0
    %475 = vmatpush1.bf16.msra.mxu0 0
    %476 = vmatprep.subr.bf16.mxu0 0
    %477 = vmatpush1.bf16.msra.mxu0 0
    %478 = vmatprep.subr.bf16.mxu0 0
    %479 = vmatpush1.bf16.msra.mxu0 0
    %480 = vmatprep.subr.bf16.mxu0 0
    %481 = vmatpush1.bf16.msra.mxu0 0
    %482 = vmatprep.subr.bf16.mxu0 0
    %483 = vmatpush1.bf16.msra.mxu0 0
    %484 = vmatprep.mubr.bf16.mxu0 0
    %485 = vmatmul.mubr.bf16.gmra.mrb[0].mxu0 %v450
    %v486 = vpop.f32.mrb[0].mxu0
    %v487 = vadd.f32 0.0, %v486
    %v488 = vpop.f32.mrb[0].mxu0
    %v489 = vpop.f32.mrb[0].mxu0
    %v490 = vpop.f32.mrb[0].mxu0
    %491 = vdwg.mxu0
    %v492 = vadd.f32 %v444, %v487
    %v493 = vtanh.pop %v492
    %v494 = vmul.f32 %v493, 0.5
    %v495 = vadd.f32 %v494, 0.5
    %v496 = vmul.f32 %v495, %v437
    %498 = vrot.lane.b32.xlu0 %v493, 64
    %v499 = vpop.permute.xlu0 %498
    %v501 = vmul.f32 %v495, %v499
    %503 = vrot.lane.b32.xlu0 %v501, 32
    %v504 = vpop.permute.xlu0 %503
    %v506 = vadd.f32 %v496, %v504
    %v507 = vtanh.pop %v506
    %509 = vrot.lane.b32.xlu0 %v507, 64
    %v510 = vpop.permute.xlu0 %509
    %v512 = vmul.f32 %v495, %v510
    %v513 = vld [vmem:[#allocation2 + $0x28] sm:$0xff]
    %v514 = vpack.c.bf16 %v512, %v512
    %516 = vrot.lane.b32.xlu0 %v514, 32
    %v517 = vpop.permute.xlu0 %516
    %v519 = vsel %vm172, %v517, 0
    %521 = vmatprep.subr.bf16.mxu0 0
    %522 = vmatpush1.bf16.msra.mxu0 %v168
    %523 = vmatprep.subr.bf16.mxu0 0
    %524 = vmatpush1.bf16.msra.mxu0 %v169
    %525 = vmatprep.subr.bf16.mxu0 0
    %526 = vmatpush1.bf16.msra.mxu0 0
    %527 = vmatprep.subr.bf16.mxu0 0
    %528 = vmatpush1.bf16.msra.mxu0 0
    %529 = vmatprep.subr.bf16.mxu0 0
    %530 = vmatpush1.bf16.msra.mxu0 0
    %531 = vmatprep.subr.bf16.mxu0 0
    %532 = vmatpush1.bf16.msra.mxu0 0
    %533 = vmatprep.subr.bf16.mxu0 0
    %534 = vmatpush1.bf16.msra.mxu0 0
    %535 = vmatprep.subr.bf16.mxu0 0
    %536 = vmatpush1.bf16.msra.mxu0 0
    %537 = vmatprep.subr.bf16.mxu0 0
    %538 = vmatpush1.bf16.msra.mxu0 0
    %539 = vmatprep.subr.bf16.mxu0 0
    %540 = vmatpush1.bf16.msra.mxu0 0
    %541 = vmatprep.subr.bf16.mxu0 0
    %542 = vmatpush1.bf16.msra.mxu0 0
    %543 = vmatprep.subr.bf16.mxu0 0
    %544 = vmatpush1.bf16.msra.mxu0 0
    %545 = vmatprep.subr.bf16.mxu0 0
    %546 = vmatpush1.bf16.msra.mxu0 0
    %547 = vmatprep.subr.bf16.mxu0 0
    %548 = vmatpush1.bf16.msra.mxu0 0
    %549 = vmatprep.subr.bf16.mxu0 0
    %550 = vmatpush1.bf16.msra.mxu0 0
    %551 = vmatprep.subr.bf16.mxu0 0
    %552 = vmatpush1.bf16.msra.mxu0 0
    %553 = vmatprep.mubr.bf16.mxu0 0
    %554 = vmatmul.mubr.bf16.gmra.mrb[0].mxu0 %v519
    %v555 = vpop.f32.mrb[0].mxu0
    %v556 = vadd.f32 0.0, %v555
    %v557 = vpop.f32.mrb[0].mxu0
    %v558 = vpop.f32.mrb[0].mxu0
    %v559 = vpop.f32.mrb[0].mxu0
    %560 = vdwg.mxu0
    %v561 = vadd.f32 %v513, %v556
    %v562 = vtanh.pop %v561
    %v563 = vmul.f32 %v562, 0.5
    %v564 = vadd.f32 %v563, 0.5
    %v565 = vmul.f32 %v564, %v506
    %567 = vrot.lane.b32.xlu0 %v562, 64
    %v568 = vpop.permute.xlu0 %567
    %v570 = vmul.f32 %v564, %v568
    %572 = vrot.lane.b32.xlu0 %v570, 32
    %v573 = vpop.permute.xlu0 %572
    %v575 = vadd.f32 %v565, %v573
    %v576 = vtanh.pop %v575
    %578 = vrot.lane.b32.xlu0 %v576, 64
    %v579 = vpop.permute.xlu0 %578
    %v581 = vmul.f32 %v564, %v579
    %v582 = vld [vmem:[#allocation2 + $0x30] sm:$0xff]
    %v583 = vpack.c.bf16 %v581, %v581
    %585 = vrot.lane.b32.xlu0 %v583, 32
    %v586 = vpop.permute.xlu0 %585
    %v588 = vsel %vm172, %v586, 0
    %590 = vmatprep.subr.bf16.mxu0 0
    %591 = vmatpush1.bf16.msra.mxu0 %v168
    %592 = vmatprep.subr.bf16.mxu0 0
    %593 = vmatpush1.bf16.msra.mxu0 %v169
    %594 = vmatprep.subr.bf16.mxu0 0
    %595 = vmatpush1.bf16.msra.mxu0 0
    %596 = vmatprep.subr.bf16.mxu0 0
    %597 = vmatpush1.bf16.msra.mxu0 0
    %598 = vmatprep.subr.bf16.mxu0 0
    %599 = vmatpush1.bf16.msra.mxu0 0
    %600 = vmatprep.subr.bf16.mxu0 0
    %601 = vmatpush1.bf16.msra.mxu0 0
    %602 = vmatprep.subr.bf16.mxu0 0
    %603 = vmatpush1.bf16.msra.mxu0 0
    %604 = vmatprep.subr.bf16.mxu0 0
    %605 = vmatpush1.bf16.msra.mxu0 0
    %606 = vmatprep.subr.bf16.mxu0 0
    %607 = vmatpush1.bf16.msra.mxu0 0
    %608 = vmatprep.subr.bf16.mxu0 0
    %609 = vmatpush1.bf16.msra.mxu0 0
    %610 = vmatprep.subr.bf16.mxu0 0
    %611 = vmatpush1.bf16.msra.mxu0 0
    %612 = vmatprep.subr.bf16.mxu0 0
    %613 = vmatpush1.bf16.msra.mxu0 0
    %614 = vmatprep.subr.bf16.mxu0 0
    %615 = vmatpush1.bf16.msra.mxu0 0
    %616 = vmatprep.subr.bf16.mxu0 0
    %617 = vmatpush1.bf16.msra.mxu0 0
    %618 = vmatprep.subr.bf16.mxu0 0
    %619 = vmatpush1.bf16.msra.mxu0 0
    %620 = vmatprep.subr.bf16.mxu0 0
    %621 = vmatpush1.bf16.msra.mxu0 0
    %622 = vmatprep.mubr.bf16.mxu0 0
    %623 = vmatmul.mubr.bf16.gmra.mrb[0].mxu0 %v588
    %v624 = vpop.f32.mrb[0].mxu0
    %v625 = vadd.f32 0.0, %v624
    %v626 = vpop.f32.mrb[0].mxu0
    %v627 = vpop.f32.mrb[0].mxu0
    %v628 = vpop.f32.mrb[0].mxu0
    %629 = vdwg.mxu0
    %v630 = vadd.f32 %v582, %v625
    %v631 = vtanh.pop %v630
    %v632 = vmul.f32 %v631, 0.5
    %v633 = vadd.f32 %v632, 0.5
    %v634 = vmul.f32 %v633, %v575
    %636 = vrot.lane.b32.xlu0 %v631, 64
    %v637 = vpop.permute.xlu0 %636
    %v639 = vmul.f32 %v633, %v637
    %641 = vrot.lane.b32.xlu0 %v639, 32
    %v642 = vpop.permute.xlu0 %641
    %v644 = vadd.f32 %v634, %v642
    %v645 = vtanh.pop %v644
    %647 = vrot.lane.b32.xlu0 %v645, 64
    %v648 = vpop.permute.xlu0 %647
    %v650 = vmul.f32 %v633, %v648
    %v651 = vld [vmem:[#allocation2 + $0x38] sm:$0xff]
    %v652 = vpack.c.bf16 %v650, %v650
    %654 = vrot.lane.b32.xlu0 %v652, 32
    %v655 = vpop.permute.xlu0 %654
    %v657 = vsel %vm172, %v655, 0
    %659 = vmatprep.subr.bf16.mxu0 0
    %660 = vmatpush1.bf16.msra.mxu0 %v168
    %661 = vmatprep.subr.bf16.mxu0 0
    %662 = vmatpush1.bf16.msra.mxu0 %v169
    %663 = vmatprep.subr.bf16.mxu0 0
    %664 = vmatpush1.bf16.msra.mxu0 0
    %665 = vmatprep.subr.bf16.mxu0 0
    %666 = vmatpush1.bf16.msra.mxu0 0
    %667 = vmatprep.subr.bf16.mxu0 0
    %668 = vmatpush1.bf16.msra.mxu0 0
    %669 = vmatprep.subr.bf16.mxu0 0
    %670 = vmatpush1.bf16.msra.mxu0 0
    %671 = vmatprep.subr.bf16.mxu0 0
    %672 = vmatpush1.bf16.msra.mxu0 0
    %673 = vmatprep.subr.bf16.mxu0 0
    %674 = vmatpush1.bf16.msra.mxu0 0
    %675 = vmatprep.subr.bf16.mxu0 0
    %676 = vmatpush1.bf16.msra.mxu0 0
    %677 = vmatprep.subr.bf16.mxu0 0
    %678 = vmatpush1.bf16.msra.mxu0 0
    %679 = vmatprep.subr.bf16.mxu0 0
    %680 = vmatpush1.bf16.msra.mxu0 0
    %681 = vmatprep.subr.bf16.mxu0 0
    %682 = vmatpush1.bf16.msra.mxu0 0
    %683 = vmatprep.subr.bf16.mxu0 0
    %684 = vmatpush1.bf16.msra.mxu0 0
    %685 = vmatprep.subr.bf16.mxu0 0
    %686 = vmatpush1.bf16.msra.mxu0 0
    %687 = vmatprep.subr.bf16.mxu0 0
    %688 = vmatpush1.bf16.msra.mxu0 0
    %689 = vmatprep.subr.bf16.mxu0 0
    %690 = vmatpush1.bf16.msra.mxu0 0
    %691 = vmatprep.mubr.bf16.mxu0 0
    %692 = vmatmul.mubr.bf16.gmra.mrb[0].mxu0 %v657
    %v693 = vpop.f32.mrb[0].mxu0
    %v694 = vadd.f32 0.0, %v693
    %v695 = vpop.f32.mrb[0].mxu0
    %v696 = vpop.f32.mrb[0].mxu0
    %v697 = vpop.f32.mrb[0].mxu0
    %698 = vdwg.mxu0
    %v699 = vadd.f32 %v651, %v694
    %v700 = vtanh.pop %v699
    %v701 = vmul.f32 %v700, 0.5
    %v702 = vadd.f32 %v701, 0.5
    %v703 = vmul.f32 %v702, %v644
    %705 = vrot.lane.b32.xlu0 %v700, 64
    %v706 = vpop.permute.xlu0 %705
    %v708 = vmul.f32 %v702, %v706
    %710 = vrot.lane.b32.xlu0 %v708, 32
    %v711 = vpop.permute.xlu0 %710
    %v713 = vadd.f32 %v703, %v711
    %v714 = vtanh.pop %v713
    %716 = vrot.lane.b32.xlu0 %v714, 64
    %v717 = vpop.permute.xlu0 %716
    %v719 = vmul.f32 %v702, %v717
    %v720 = vld [vmem:[%s4] sm:$0xff]
    %v721 = vld [vmem:[%s4 + $0x8] sm:$0xff]
    %v722 = vld [vmem:[%s4 + $0x10] sm:$0xff]
    %v723 = vld [vmem:[%s4 + $0x18] sm:$0xff]
    %v724 = vld [vmem:[%s5] sm:$0x1]
    %v726 = vlaneseq
    %v727 = vshrl.u32 %v726, 7
    %v728 = vsub.s32 0, %v727
    %v729 = vrot.slane %v724, %v728
    %732 = vrot.lane.b32.xlu0 %v719, 32
    %v733 = vpop.permute.xlu0 %732
    %v734 = vsel %vm172, %v733, 0
    %736 = vmatprep.subr.mxu0 0.0
    %737 = vmatpush1.msra.mxu0 %v720
    %738 = vmatprep.subr.mxu0 0.0
    %739 = vmatpush1.msra.mxu0 %v721
    %740 = vmatprep.subr.mxu0 0.0
    %741 = vmatpush1.msra.mxu0 %v722
    %742 = vmatprep.subr.mxu0 0.0
    %743 = vmatpush1.msra.mxu0 %v723
    %744 = vmatprep.subr.mxu0 0.0
    %745 = vmatpush1.msra.mxu0 0.0
    %746 = vmatprep.subr.mxu0 0.0
    %747 = vmatpush1.msra.mxu0 0.0
    %748 = vmatprep.subr.mxu0 0.0
    %749 = vmatpush1.msra.mxu0 0.0
    %750 = vmatprep.subr.mxu0 0.0
    %751 = vmatpush1.msra.mxu0 0.0
    %752 = vmatprep.subr.mxu0 0.0
    %753 = vmatpush1.msra.mxu0 0.0
    %754 = vmatprep.subr.mxu0 0.0
    %755 = vmatpush1.msra.mxu0 0.0
    %756 = vmatprep.subr.mxu0 0.0
    %757 = vmatpush1.msra.mxu0 0.0
    %758 = vmatprep.subr.mxu0 0.0
    %759 = vmatpush1.msra.mxu0 0.0
    %760 = vmatprep.subr.mxu0 0.0
    %761 = vmatpush1.msra.mxu0 0.0
    %762 = vmatprep.subr.mxu0 0.0
    %763 = vmatpush1.msra.mxu0 0.0
    %764 = vmatprep.subr.mxu0 0.0
    %765 = vmatpush1.msra.mxu0 0.0
    %766 = vmatprep.subr.mxu0 0.0
    %767 = vmatpush1.msra.mxu0 0.0
    %768 = vmatprep.subr.mxu0 0.0
    %769 = vmatpush1.msra.mxu0 0.0
    %770 = vmatprep.subr.mxu0 0.0
    %771 = vmatpush1.msra.mxu0 0.0
    %772 = vmatprep.subr.mxu0 0.0
    %773 = vmatpush1.msra.mxu0 0.0
    %774 = vmatprep.subr.mxu0 0.0
    %775 = vmatpush1.msra.mxu0 0.0
    %776 = vmatprep.subr.mxu0 0.0
    %777 = vmatpush1.msra.mxu0 0.0
    %778 = vmatprep.subr.mxu0 0.0
    %779 = vmatpush1.msra.mxu0 0.0
    %780 = vmatprep.subr.mxu0 0.0
    %781 = vmatpush1.msra.mxu0 0.0
    %782 = vmatprep.subr.mxu0 0.0
    %783 = vmatpush1.msra.mxu0 0.0
    %784 = vmatprep.subr.mxu0 0.0
    %785 = vmatpush1.msra.mxu0 0.0
    %786 = vmatprep.subr.mxu0 0.0
    %787 = vmatpush1.msra.mxu0 0.0
    %788 = vmatprep.subr.mxu0 0.0
    %789 = vmatpush1.msra.mxu0 0.0
    %790 = vmatprep.subr.mxu0 0.0
    %791 = vmatpush1.msra.mxu0 0.0
    %792 = vmatprep.subr.mxu0 0.0
    %793 = vmatpush1.msra.mxu0 0.0
    %794 = vmatprep.subr.mxu0 0.0
    %795 = vmatpush1.msra.mxu0 0.0
    %796 = vmatprep.subr.mxu0 0.0
    %797 = vmatpush1.msra.mxu0 0.0
    %798 = vmatprep.subr.mxu0 0.0
    %799 = vmatpush1.msra.mxu0 0.0
    %800 = vmatprep.mubr.f32.mxu0 0.0
    %801 = vmatmul.mubr.f32.gmra.mrb[0].mxu0 %v734
    %v802 = vpop.f32.mrb[0].mxu0
    %v803 = vadd.f32 %v729, %v802
    %v804 = vpop.f32.mrb[0].mxu0
    %805 = vdwg.mxu0
    %v806 = vmax.f32 %v803, 0.0
    %v807 = vld [vmem:[#allocation3] sm:$0xff]
    %v808 = vld [vmem:[#allocation3 + $0x8] sm:$0xff]
    %v809 = vld [vmem:[#allocation3 + $0x10] sm:$0xff]
    %v810 = vld [vmem:[#allocation3 + $0x18] sm:$0xff]
    %v811 = vld [vmem:[#allocation3 + $0x20] sm:$0xff]
    %v812 = vld [vmem:[#allocation3 + $0x28] sm:$0xff]
    %v813 = vld [vmem:[#allocation3 + $0x30] sm:$0xff]
    %v814 = vld [vmem:[#allocation3 + $0x38] sm:$0xff]
    %v815 = vld [vmem:[#allocation3 + $0x40] sm:$0xff]
    %v816 = vld [vmem:[#allocation3 + $0x48] sm:$0xff]
    %v817 = vld [vmem:[#allocation3 + $0x50] sm:$0xff]
    %v818 = vld [vmem:[#allocation3 + $0x58] sm:$0xff]
    %v819 = vld [vmem:[#allocation3 + $0x60] sm:$0xff]
    %v820 = vld [vmem:[#allocation3 + $0x68] sm:$0xff]
    %v821 = vld [vmem:[#allocation3 + $0x70] sm:$0xff]
    %v822 = vld [vmem:[#allocation3 + $0x78] sm:$0xff]
    %v823 = vld [vmem:[%s7] sm:$0x1]
    %v825 = vlaneseq
    %v826 = vshrl.u32 %v825, 7
    %v827 = vsub.s32 0, %v826
    %v828 = vrot.slane %v823, %v827
    %830 = vmatprep.subr.mxu0 0.0
    %831 = vmatpush1.msra.mxu0 %v807
    %832 = vmatprep.subr.mxu0 0.0
    %833 = vmatpush1.msra.mxu0 %v808
    %834 = vmatprep.subr.mxu0 0.0
    %835 = vmatpush1.msra.mxu0 %v809
    %836 = vmatprep.subr.mxu0 0.0
    %837 = vmatpush1.msra.mxu0 %v810
    %838 = vmatprep.subr.mxu0 0.0
    %839 = vmatpush1.msra.mxu0 %v811
    %840 = vmatprep.subr.mxu0 0.0
    %841 = vmatpush1.msra.mxu0 %v812
    %842 = vmatprep.subr.mxu0 0.0
    %843 = vmatpush1.msra.mxu0 %v813
    %844 = vmatprep.subr.mxu0 0.0
    %845 = vmatpush1.msra.mxu0 %v814
    %846 = vmatprep.subr.mxu0 0.0
    %847 = vmatpush1.msra.mxu0 %v815
    %848 = vmatprep.subr.mxu0 0.0
    %849 = vmatpush1.msra.mxu0 %v816
    %850 = vmatprep.subr.mxu0 0.0
    %851 = vmatpush1.msra.mxu0 %v817
    %852 = vmatprep.subr.mxu0 0.0
    %853 = vmatpush1.msra.mxu0 %v818
    %854 = vmatprep.subr.mxu0 0.0
    %855 = vmatpush1.msra.mxu0 %v819
    %856 = vmatprep.subr.mxu0 0.0
    %857 = vmatpush1.msra.mxu0 %v820
    %858 = vmatprep.subr.mxu0 0.0
    %859 = vmatpush1.msra.mxu0 %v821
    %860 = vmatprep.subr.mxu0 0.0
    %861 = vmatpush1.msra.mxu0 %v822
    %862 = vmatprep.subr.mxu0 0.0
    %863 = vmatpush1.msra.mxu0 0.0
    %864 = vmatprep.subr.mxu0 0.0
    %865 = vmatpush1.msra.mxu0 0.0
    %866 = vmatprep.subr.mxu0 0.0
    %867 = vmatpush1.msra.mxu0 0.0
    %868 = vmatprep.subr.mxu0 0.0
    %869 = vmatpush1.msra.mxu0 0.0
    %870 = vmatprep.subr.mxu0 0.0
    %871 = vmatpush1.msra.mxu0 0.0
    %872 = vmatprep.subr.mxu0 0.0
    %873 = vmatpush1.msra.mxu0 0.0
    %874 = vmatprep.subr.mxu0 0.0
    %875 = vmatpush1.msra.mxu0 0.0
    %876 = vmatprep.subr.mxu0 0.0
    %877 = vmatpush1.msra.mxu0 0.0
    %878 = vmatprep.subr.mxu0 0.0
    %879 = vmatpush1.msra.mxu0 0.0
    %880 = vmatprep.subr.mxu0 0.0
    %881 = vmatpush1.msra.mxu0 0.0
    %882 = vmatprep.subr.mxu0 0.0
    %883 = vmatpush1.msra.mxu0 0.0
    %884 = vmatprep.subr.mxu0 0.0
    %885 = vmatpush1.msra.mxu0 0.0
    %886 = vmatprep.subr.mxu0 0.0
    %887 = vmatpush1.msra.mxu0 0.0
    %888 = vmatprep.subr.mxu0 0.0
    %889 = vmatpush1.msra.mxu0 0.0
    %890 = vmatprep.subr.mxu0 0.0
    %891 = vmatpush1.msra.mxu0 0.0
    %892 = vmatprep.subr.mxu0 0.0
    %893 = vmatpush1.msra.mxu0 0.0
    %894 = vmatprep.mubr.f32.mxu0 0.0
    %895 = vmatmul.mubr.f32.gmra.mrb[0].mxu0 %v806
    %v896 = vpop.f32.mrb[0].mxu0
    %v897 = vadd.f32 %v828, %v896
    %v898 = vpop.f32.mrb[0].mxu0
    %899 = vdwg.mxu0
    %900 = vst [vmem:[#allocation6] sm:$0xff] %v897
    // Predicated region
    $region38: #{tpu_custom_call.1} parent=1 // pred_check
      _
    $region39: #{tpu_custom_call.1} parent=1 // pred_check_branch
      %902 = sbr.rel (0) target = $region41
    $region40: #{tpu_custom_call.1} parent=1 // pred_region
      %s904 = ssub.s32 128, 128
      %905 = vsyncadd [#allocation5], %s904
      %s907 = sshll.u32 [#allocation6], 4
      %s908 = int_to_ptr.vmem [resolvable:$true] %s907
      %910 = dma.vmem_to_hbm [thread:$0]  %s908, 128, %s8, [#allocation5]
    $region41: #{tpu_custom_call.1} parent=1 // pred_fallthru
      _
    // Predicated region
    $region42: #{tpu_custom_call.1} parent=1 // pred_check
      _
    $region43: #{tpu_custom_call.1} parent=1 // pred_check_branch
      %912 = sbr.rel (0) target = $region45
    $region44: #{tpu_custom_call.1} parent=1 // pred_region
      %913 = dma.done [#allocation5], 128
    $region45: #{tpu_custom_call.1} parent=1 // pred_fallthru
      _
    %914 = vsyncpa [#allocation4], 1
    %915 = vsyncpa [#allocation5], 1

</llo_original>
